<compile_context>
chip_gen: v7x
topology: tpu7x:2x2x1
jax: 0.10.0
libtpu: 0.0.40
codegen_flags: <defaults>
</compile_context>

<pallas_src>
import functools

import jax
import jax.numpy as jnp
from jax.experimental import pallas as pl
from jax.experimental.pallas import tpu as pltpu


def _round_up(x: int, m: int) -> int:
    return ((x + m - 1) // m) * m


def _mlp_kernel(x_ref, w1_ref, b1_ref, w2_ref, b2_ref, w3_ref, b3_ref,
                s1_ref, s2_ref, s3_ref):
    # Layer 1: Linear(dim_in -> dim_hidden)
    x = x_ref[...]
    s1 = jnp.dot(x, w1_ref[...], preferred_element_type=jnp.float32) + b1_ref[...]
    a2 = jnp.maximum(s1, 0.0)                       # ReLU (kept in VMEM only)

    # Layer 2: Linear(dim_hidden -> dim_hidden)
    s2 = jnp.dot(a2, w2_ref[...], preferred_element_type=jnp.float32) + b2_ref[...]
    a3 = jnp.maximum(s2, 0.0)                       # ReLU (kept in VMEM only)

    # Layer 3: Linear(dim_hidden -> dim_out)
    s3 = jnp.dot(a3, w3_ref[...], preferred_element_type=jnp.float32) + b3_ref[...]

    s1_ref[...] = s1.astype(s1_ref.dtype)
    s2_ref[...] = s2.astype(s2_ref.dtype)
    s3_ref[...] = s3.astype(s3_ref.dtype)


@jax.jit
def mlp_forward(x, params):
    """x: (B, C, H, W) float32.  params: dict of transposed weights/biases."""
    w1, b1 = params["w1"], params["b1"]
    w2, b2 = params["w2"], params["b2"]
    w3, b3 = params["w3"], params["b3"]

    B = x.shape[0]
    dim_in = x.shape[-3] * x.shape[-2] * x.shape[-1]
    dim_hidden = w1.shape[1]
    dim_out = w3.shape[1]
    f32 = jnp.float32

    x_flat = x.reshape(B, dim_in)                   # x.view(-1, C*H*W)

    # ---- lane-dense padded dims (multiples of 128) and batch tiling ----
    dim_in_p = _round_up(dim_in, 128)
    dim_h_p = _round_up(dim_hidden, 128)
    dim_out_p = _round_up(dim_out, 128)

    # Batch tile: biggest of {up-to-256 rows}, batch padded to a tile multiple.
    TB = min(256, _round_up(B, 8))
    B_p = _round_up(B, TB)
    grid = (B_p // TB,)

    # Zero-pad inputs / weights / biases (pads contribute exactly zero).
    x_p = jnp.pad(x_flat, ((0, B_p - B), (0, dim_in_p - dim_in)))
    w1_p = jnp.pad(w1, ((0, dim_in_p - dim_in), (0, dim_h_p - dim_hidden)))
    w2_p = jnp.pad(w2, ((0, dim_h_p - dim_hidden), (0, dim_h_p - dim_hidden)))
    w3_p = jnp.pad(w3, ((0, dim_h_p - dim_hidden), (0, dim_out_p - dim_out)))
    b1_p = jnp.pad(b1, (0, dim_h_p - dim_hidden)).reshape(1, dim_h_p)
    b2_p = jnp.pad(b2, (0, dim_h_p - dim_hidden)).reshape(1, dim_h_p)
    b3_p = jnp.pad(b3, (0, dim_out_p - dim_out)).reshape(1, dim_out_p)

    batch_block = lambda cols: pl.BlockSpec((TB, cols), lambda i: (i, 0))
    resident = lambda shape: pl.BlockSpec(shape, lambda i: (0, 0))

    s1_p, s2_p, s3_p = pl.pallas_call(
        _mlp_kernel,
        out_shape=(
            jax.ShapeDtypeStruct((B_p, dim_h_p), f32),    # s1
            jax.ShapeDtypeStruct((B_p, dim_h_p), f32),    # s2
            jax.ShapeDtypeStruct((B_p, dim_out_p), f32),  # s3 (final output)
        ),
        grid=grid,
        in_specs=[
            batch_block(dim_in_p),              # x tile
            resident((dim_in_p, dim_h_p)),      # w1 (VMEM-resident)
            resident((1, dim_h_p)),             # b1
            resident((dim_h_p, dim_h_p)),       # w2
            resident((1, dim_h_p)),             # b2
            resident((dim_h_p, dim_out_p)),     # w3
            resident((1, dim_out_p)),           # b3
        ],
        out_specs=(
            batch_block(dim_h_p),
            batch_block(dim_h_p),
            batch_block(dim_out_p),
        ),
        compiler_params=pltpu.CompilerParams(
            dimension_semantics=("parallel",),
            vmem_limit_bytes=64 * 1024 * 1024,
        ),
    )(x_p, w1_p, b1_p, w2_p, b2_p, w3_p, b3_p)

    # Slice padding off; recompute the cheap elementwise ReLUs in the wrapper
    # (fuses into consumers in XLA, saves HBM writeback inside the kernel).
    s1 = s1_p[:B, :dim_hidden]
    s2 = s2_p[:B, :dim_hidden]
    s3 = s3_p[:B, :dim_out]
    a2 = jnp.maximum(s1, 0.0)
    a3 = jnp.maximum(s2, 0.0)

    out = s3
    s_list = [s1, s2, s3]
    a_list = [x_flat, a2, a3]
    return out, s_list, a_list


def init_params(key, dim_in, dim_hidden, dim_out):
    """Deterministic init mimicking PyTorch nn.Linear defaults
    (U(-1/sqrt(fan_in), 1/sqrt(fan_in)))."""
    ks = jax.random.split(key, 6)

    def lin(kw, kb, fan_in, fan_out):
        bound = 1.0 / jnp.sqrt(jnp.float32(fan_in))
        w = jax.random.uniform(kw, (fan_in, fan_out), jnp.float32, -bound, bound)
        b = jax.random.uniform(kb, (fan_out,), jnp.float32, -bound, bound)
        return w, b

    w1, b1 = lin(ks[0], ks[1], dim_in, dim_hidden)
    w2, b2 = lin(ks[2], ks[3], dim_hidden, dim_hidden)
    w3, b3 = lin(ks[4], ks[5], dim_hidden, dim_out)
    return {"w1": w1, "b1": b1, "w2": w2, "b2": b2, "w3": w3, "b3": b3}


if __name__ == "__main__":
    key = jax.random.PRNGKey(0)
    k_x, k_p = jax.random.split(key)

    # Small shapes consistent with the module's forward:
    # x is (B, C, H, W) -> flattened to dim_in = C*H*W.
    B, C, H, W = 2, 4, 16, 16
    dim_in = C * H * W          # 1024
    dim_hidden = 32
    dim_out = 10

    x = jax.random.normal(k_x, (B, C, H, W), dtype=jnp.float32)
    params = init_params(k_p, dim_in, dim_hidden, dim_out)

    out, s, a = mlp_forward(x, params)
    jax.block_until_ready(out)

    # Cross-check against a plain-JAX reference.
    xf = x.reshape(B, dim_in)
    r1 = xf @ params["w1"] + params["b1"]
    r2 = jnp.maximum(r1, 0) @ params["w2"] + params["b2"]
    r3 = jnp.maximum(r2, 0) @ params["w3"] + params["b3"]
    assert jnp.allclose(out, r3, atol=1e-5, rtol=1e-5)
    assert jnp.allclose(s[0], r1, atol=1e-5, rtol=1e-5)
    assert jnp.allclose(s[1], r2, atol=1e-5, rtol=1e-5)
    assert jnp.allclose(s[2], r3, atol=1e-5, rtol=1e-5)
    assert jnp.allclose(a[0], xf, atol=1e-6, rtol=1e-6)
    assert jnp.allclose(a[1], jnp.maximum(r1, 0), atol=1e-5, rtol=1e-5)
    assert jnp.allclose(a[2], jnp.maximum(r2, 0), atol=1e-5, rtol=1e-5)

    print("KERNEL_OK")
</pallas_src>

<mosaic_0001>
module attributes {stable_mosaic.version = 11 : i64} {
  func.func @_mlp_kernel(%arg0: i32, %arg1: memref<8x1024xf32, #tpu.memory_space<vmem>>, %arg2: memref<1024x128xf32, #tpu.memory_space<vmem>>, %arg3: memref<1x128xf32, #tpu.memory_space<vmem>>, %arg4: memref<128x128xf32, #tpu.memory_space<vmem>>, %arg5: memref<1x128xf32, #tpu.memory_space<vmem>>, %arg6: memref<128x128xf32, #tpu.memory_space<vmem>>, %arg7: memref<1x128xf32, #tpu.memory_space<vmem>>, %arg8: memref<8x128xf32, #tpu.memory_space<vmem>>, %arg9: memref<8x128xf32, #tpu.memory_space<vmem>>, %arg10: memref<8x128xf32, #tpu.memory_space<vmem>>) attributes {dimension_semantics = [#tpu.dimension_semantics<parallel>], iteration_bounds = array<i64: 1>, scalar_prefetch = 0 : i64, scratch_operands = 0 : i64, tpu.core_type = #tpu.core_type<tc>, window_params = [{transform_indices = @transform_0, window_bounds = array<i64: 8, 1024>}, {pipeline_mode = #tpu.pipeline_mode<synchronous>, transform_indices = @transform_1, window_bounds = array<i64: 1024, 128>}, {pipeline_mode = #tpu.pipeline_mode<synchronous>, transform_indices = @transform_2, window_bounds = array<i64: 1, 128>}, {pipeline_mode = #tpu.pipeline_mode<synchronous>, transform_indices = @transform_3, window_bounds = array<i64: 128, 128>}, {pipeline_mode = #tpu.pipeline_mode<synchronous>, transform_indices = @transform_4, window_bounds = array<i64: 1, 128>}, {pipeline_mode = #tpu.pipeline_mode<synchronous>, transform_indices = @transform_5, window_bounds = array<i64: 128, 128>}, {pipeline_mode = #tpu.pipeline_mode<synchronous>, transform_indices = @transform_6, window_bounds = array<i64: 1, 128>}, {transform_indices = @transform_7, window_bounds = array<i64: 8, 128>}, {transform_indices = @transform_8, window_bounds = array<i64: 8, 128>}, {transform_indices = @transform_9, window_bounds = array<i64: 8, 128>}]} {
    %c0 = arith.constant 0 : index
    %c0_0 = arith.constant 0 : index
    %0 = vector.load %arg1[%c0, %c0_0] : memref<8x1024xf32, #tpu.memory_space<vmem>>, vector<8x1024xf32>
    %c0_1 = arith.constant 0 : index
    %c0_2 = arith.constant 0 : index
    %1 = vector.load %arg2[%c0_1, %c0_2] : memref<1024x128xf32, #tpu.memory_space<vmem>>, vector<1024x128xf32>
    %cst = arith.constant dense<0.000000e+00> : vector<8x128xf32>
    %2 = tpu.matmul %0, %1, %cst {dimension_numbers = #tpu.dot_dimension_numbers<[1], [0], [0], [1], [0, 0, 1, 1], [], []>} : vector<8x1024xf32>, vector<1024x128xf32>, vector<8x128xf32> -> vector<8x128xf32>
    %c0_3 = arith.constant 0 : index
    %c0_4 = arith.constant 0 : index
    %3 = vector.load %arg3[%c0_3, %c0_4] : memref<1x128xf32, #tpu.memory_space<vmem>>, vector<1x128xf32>
    %4 = vector.broadcast %3 : vector<1x128xf32> to vector<8x128xf32>
    %5 = arith.addf %2, %4 : vector<8x128xf32>
    %cst_5 = arith.constant 0.000000e+00 : f32
    %6 = vector.broadcast %cst_5 : f32 to vector<8x128xf32>
    %7 = arith.maximumf %5, %6 : vector<8x128xf32>
    %c0_6 = arith.constant 0 : index
    %c0_7 = arith.constant 0 : index
    %8 = vector.load %arg4[%c0_6, %c0_7] : memref<128x128xf32, #tpu.memory_space<vmem>>, vector<128x128xf32>
    %cst_8 = arith.constant dense<0.000000e+00> : vector<8x128xf32>
    %9 = tpu.matmul %7, %8, %cst_8 {dimension_numbers = #tpu.dot_dimension_numbers<[1], [0], [0], [1], [0, 0, 1, 1], [], []>} : vector<8x128xf32>, vector<128x128xf32>, vector<8x128xf32> -> vector<8x128xf32>
    %c0_9 = arith.constant 0 : index
    %c0_10 = arith.constant 0 : index
    %10 = vector.load %arg5[%c0_9, %c0_10] : memref<1x128xf32, #tpu.memory_space<vmem>>, vector<1x128xf32>
    %11 = vector.broadcast %10 : vector<1x128xf32> to vector<8x128xf32>
    %12 = arith.addf %9, %11 : vector<8x128xf32>
    %cst_11 = arith.constant 0.000000e+00 : f32
    %13 = vector.broadcast %cst_11 : f32 to vector<8x128xf32>
    %14 = arith.maximumf %12, %13 : vector<8x128xf32>
    %c0_12 = arith.constant 0 : index
    %c0_13 = arith.constant 0 : index
    %15 = vector.load %arg6[%c0_12, %c0_13] : memref<128x128xf32, #tpu.memory_space<vmem>>, vector<128x128xf32>
    %cst_14 = arith.constant dense<0.000000e+00> : vector<8x128xf32>
    %16 = tpu.matmul %14, %15, %cst_14 {dimension_numbers = #tpu.dot_dimension_numbers<[1], [0], [0], [1], [0, 0, 1, 1], [], []>} : vector<8x128xf32>, vector<128x128xf32>, vector<8x128xf32> -> vector<8x128xf32>
    %c0_15 = arith.constant 0 : index
    %c0_16 = arith.constant 0 : index
    %17 = vector.load %arg7[%c0_15, %c0_16] : memref<1x128xf32, #tpu.memory_space<vmem>>, vector<1x128xf32>
    %18 = vector.broadcast %17 : vector<1x128xf32> to vector<8x128xf32>
    %19 = arith.addf %16, %18 : vector<8x128xf32>
    %c0_17 = arith.constant 0 : index
    %c0_18 = arith.constant 0 : index
    %20 = vector.load %arg8[%c0_17, %c0_18] : memref<8x128xf32, #tpu.memory_space<vmem>>, vector<8x128xf32>
    tpu.vector_store %arg8[%c0_17, %c0_18], %5 {strides = array<i32>} : memref<8x128xf32, #tpu.memory_space<vmem>>, vector<8x128xf32>,
    %c0_19 = arith.constant 0 : index
    %c0_20 = arith.constant 0 : index
    %21 = vector.load %arg9[%c0_19, %c0_20] : memref<8x128xf32, #tpu.memory_space<vmem>>, vector<8x128xf32>
    tpu.vector_store %arg9[%c0_19, %c0_20], %12 {strides = array<i32>} : memref<8x128xf32, #tpu.memory_space<vmem>>, vector<8x128xf32>,
    %c0_21 = arith.constant 0 : index
    %c0_22 = arith.constant 0 : index
    %22 = vector.load %arg10[%c0_21, %c0_22] : memref<8x128xf32, #tpu.memory_space<vmem>>, vector<8x128xf32>
    tpu.vector_store %arg10[%c0_21, %c0_22], %19 {strides = array<i32>} : memref<8x128xf32, #tpu.memory_space<vmem>>, vector<8x128xf32>,
    return
  }
  func.func @transform_0(%arg0: i32) -> (i32, i32) {
    %c0_i32 = arith.constant 0 : i32
    %c0_i32_0 = arith.constant 0 : i32
    return %arg0, %c0_i32 : i32, i32
  }
  func.func @transform_1(%arg0: i32) -> (i32, i32) {
    %c0_i32 = arith.constant 0 : i32
    %c0_i32_0 = arith.constant 0 : i32
    %c0_i32_1 = arith.constant 0 : i32
    return %c0_i32, %c0_i32_0 : i32, i32
  }
  func.func @transform_2(%arg0: i32) -> (i32, i32) {
    %c0_i32 = arith.constant 0 : i32
    %c0_i32_0 = arith.constant 0 : i32
    %c0_i32_1 = arith.constant 0 : i32
    return %c0_i32, %c0_i32_0 : i32, i32
  }
  func.func @transform_3(%arg0: i32) -> (i32, i32) {
    %c0_i32 = arith.constant 0 : i32
    %c0_i32_0 = arith.constant 0 : i32
    %c0_i32_1 = arith.constant 0 : i32
    return %c0_i32, %c0_i32_0 : i32, i32
  }
  func.func @transform_4(%arg0: i32) -> (i32, i32) {
    %c0_i32 = arith.constant 0 : i32
    %c0_i32_0 = arith.constant 0 : i32
    %c0_i32_1 = arith.constant 0 : i32
    return %c0_i32, %c0_i32_0 : i32, i32
  }
  func.func @transform_5(%arg0: i32) -> (i32, i32) {
    %c0_i32 = arith.constant 0 : i32
    %c0_i32_0 = arith.constant 0 : i32
    %c0_i32_1 = arith.constant 0 : i32
    return %c0_i32, %c0_i32_0 : i32, i32
  }
  func.func @transform_6(%arg0: i32) -> (i32, i32) {
    %c0_i32 = arith.constant 0 : i32
    %c0_i32_0 = arith.constant 0 : i32
    %c0_i32_1 = arith.constant 0 : i32
    return %c0_i32, %c0_i32_0 : i32, i32
  }
  func.func @transform_7(%arg0: i32) -> (i32, i32) {
    %c0_i32 = arith.constant 0 : i32
    %c0_i32_0 = arith.constant 0 : i32
    return %arg0, %c0_i32 : i32, i32
  }
  func.func @transform_8(%arg0: i32) -> (i32, i32) {
    %c0_i32 = arith.constant 0 : i32
    %c0_i32_0 = arith.constant 0 : i32
    return %arg0, %c0_i32 : i32, i32
  }
  func.func @transform_9(%arg0: i32) -> (i32, i32) {
    %c0_i32 = arith.constant 0 : i32
    %c0_i32_0 = arith.constant 0 : i32
    return %arg0, %c0_i32 : i32, i32
  }
}

</mosaic_0001>

<llo_original>
// kernel: mlp_forward.1
$region0: #{mlp_forward.1}
  #allocation0 [shape = 'u32[]', space=smem, size = 0x4, offset = 0x4, fixed_abs, tag = 'smem constant byte address 0x4 - core index']
  #allocation1 [shape = 'u32[144,128]{1,0:T(1,128)}', space=vmem, size = 0x12000, scoped, tag = 'internal scratch']
  %s0 = inlined_call_operand.hbm [shape: f32[8,1024], index: 0, kind: input, shape index: {}]
  %s1 = inlined_call_operand.hbm [shape: f32[1024,128], index: 1, kind: input, shape index: {}]
  %s2 = inlined_call_operand.hbm [shape: f32[1,128], index: 2, kind: input, shape index: {}]
  %s3 = inlined_call_operand.hbm [shape: f32[128,128], index: 3, kind: input, shape index: {}]
  %s4 = inlined_call_operand.hbm [shape: f32[1,128], index: 4, kind: input, shape index: {}]
  %s5 = inlined_call_operand.hbm [shape: f32[128,128], index: 5, kind: input, shape index: {}]
  %s6 = inlined_call_operand.hbm [shape: f32[1,128], index: 6, kind: input, shape index: {}]
  %s7 = inlined_call_operand.hbm [shape: f32[8,128], index: 7, kind: output, shape index: {0}]
  %s8 = inlined_call_operand.hbm [shape: f32[8,128], index: 8, kind: output, shape index: {1}]
  %s9 = inlined_call_operand.hbm [shape: f32[8,128], index: 9, kind: output, shape index: {2}]
  %10 = xla_tuple %s7, %s8, %s9
  %s11 = sld [smem:[#allocation0]]
  $region82: #{mlp_forward.1} parent=0
    _
  %s13 = ssub.s32 1, %s11
  %s14 = scalar_select 0, %s13, %s11
  $region1: #{mlp_forward.1} parent=0
    #allocation2 [shape = 'u8[32768]{0}', space=vmem, size = 0x8000, scoped, tag = 'input window, operand 0, single buffered']
    #allocation3 [shape = 's32[1]{0}', space=sflag, size = 0x4, scoped, tag = 'scoped memory for mlp_forward.1']
    #allocation4 [shape = 's32[1]{0}', space=sflag, size = 0x4, scoped, tag = 'scoped memory for mlp_forward.1']
    #allocation5 [shape = 'u8[524288]{0}', space=vmem, size = 0x80000, scoped, tag = 'input window, operand 1, single buffered']
    #allocation6 [shape = 's32[1]{0}', space=sflag, size = 0x4, scoped, tag = 'scoped memory for mlp_forward.1']
    #allocation7 [shape = 'u8[512]{0}', space=vmem, size = 0x400, scoped, tag = 'input window, operand 2, single buffered']
    #allocation8 [shape = 'u8[65536]{0}', space=vmem, size = 0x10000, scoped, tag = 'input window, operand 3, single buffered']
    #allocation9 [shape = 's32[1]{0}', space=sflag, size = 0x4, scoped, tag = 'scoped memory for mlp_forward.1']
    #allocation10 [shape = 'u8[512]{0}', space=vmem, size = 0x400, scoped, tag = 'input window, operand 4, single buffered']
    #allocation11 [shape = 'u8[65536]{0}', space=vmem, size = 0x10000, scoped, tag = 'input window, operand 5, single buffered']
    #allocation12 [shape = 's32[1]{0}', space=sflag, size = 0x4, scoped, tag = 'scoped memory for mlp_forward.1']
    #allocation13 [shape = 'u8[512]{0}', space=vmem, size = 0x400, scoped, tag = 'input window, operand 6, single buffered']
    #allocation14 [shape = 'u8[4096]{0}', space=vmem, size = 0x1000, scoped, tag = 'output window, operand 0, single buffered']
    #allocation15 [shape = 'u8[4096]{0}', space=vmem, size = 0x1000, scoped, tag = 'output window, operand 1, single buffered']
    #allocation16 [shape = 's32[1]{0}', space=sflag, size = 0x4, scoped, tag = 'scoped memory for mlp_forward.1']
    #allocation17 [shape = 'u8[4096]{0}', space=vmem, size = 0x1000, scoped, tag = 'output window, operand 2, single buffered']
    %15 = vsyncpa [#allocation3], 0
    %16 = vsyncpa [#allocation6], 0
    %17 = vsyncpa [#allocation9], 0
    %18 = vsyncpa [#allocation12], 0
    %19 = vsyncpa [#allocation4], 0
    %20 = vsyncpa [#allocation16], 0
    // Predicated region
    $region2: #{mlp_forward.1} parent=1 // pred_check
      _
    $region3: #{mlp_forward.1} parent=1 // pred_check_branch
      %22 = sbr.rel (0) target = $region5
    $region4: #{mlp_forward.1} parent=1 // pred_region
      %s24 = ssub.s32 1024, 1024
      %25 = vsyncadd [#allocation3], %s24
      %s27 = sshll.u32 [#allocation2], 4
      %s28 = int_to_ptr.vmem [resolvable:$true] %s27
      %30 = dma.hbm_to_vmem [thread:$0]  %s0, 1024, %s28, [#allocation3]
    $region5: #{mlp_forward.1} parent=1 // pred_fallthru
      _
    // Predicated region
    $region6: #{mlp_forward.1} parent=1 // pred_check
      _
    $region7: #{mlp_forward.1} parent=1 // pred_check_branch
      %32 = sbr.rel (0) target = $region9
    $region8: #{mlp_forward.1} parent=1 // pred_region
      %s34 = ssub.s32 16384, 16384
      %35 = vsyncadd [#allocation6], %s34
      %s36 = sshll.u32 [#allocation5], 4
      %s37 = int_to_ptr.vmem [resolvable:$true] %s36
      %42 = dma.hbm_to_vmem [thread:$0]  %s1, 16384, %s37, [#allocation6], 128, 128, 8
    $region9: #{mlp_forward.1} parent=1 // pred_fallthru
      _
    // Predicated region
    $region10: #{mlp_forward.1} parent=1 // pred_check
      _
    $region11: #{mlp_forward.1} parent=1 // pred_check_branch
      %44 = sbr.rel (0) target = $region13
    $region12: #{mlp_forward.1} parent=1 // pred_region
      %s46 = ssub.s32 16, 16
      %47 = vsyncadd [#allocation6], %s46
      %s49 = sshll.u32 [#allocation7], 4
      %s50 = int_to_ptr.vmem [resolvable:$true] %s49
      %52 = dma.hbm_to_vmem [thread:$0]  %s2, 16, %s50, [#allocation6]
    $region13: #{mlp_forward.1} parent=1 // pred_fallthru
      _
    // Predicated region
    $region14: #{mlp_forward.1} parent=1 // pred_check
      _
    $region15: #{mlp_forward.1} parent=1 // pred_check_branch
      %54 = sbr.rel (0) target = $region17
    $region16: #{mlp_forward.1} parent=1 // pred_region
      %s56 = ssub.s32 2048, 2048
      %57 = vsyncadd [#allocation9], %s56
      %s58 = sshll.u32 [#allocation8], 4
      %s59 = int_to_ptr.vmem [resolvable:$true] %s58
      %64 = dma.hbm_to_vmem [thread:$0]  %s3, 2048, %s59, [#allocation9], 128, 128, 8
    $region17: #{mlp_forward.1} parent=1 // pred_fallthru
      _
    // Predicated region
    $region18: #{mlp_forward.1} parent=1 // pred_check
      _
    $region19: #{mlp_forward.1} parent=1 // pred_check_branch
      %66 = sbr.rel (0) target = $region21
    $region20: #{mlp_forward.1} parent=1 // pred_region
      %s68 = ssub.s32 16, 16
      %69 = vsyncadd [#allocation9], %s68
      %s71 = sshll.u32 [#allocation10], 4
      %s72 = int_to_ptr.vmem [resolvable:$true] %s71
      %74 = dma.hbm_to_vmem [thread:$0]  %s4, 16, %s72, [#allocation9]
    $region21: #{mlp_forward.1} parent=1 // pred_fallthru
      _
    // Predicated region
    $region22: #{mlp_forward.1} parent=1 // pred_check
      _
    $region23: #{mlp_forward.1} parent=1 // pred_check_branch
      %76 = sbr.rel (0) target = $region25
    $region24: #{mlp_forward.1} parent=1 // pred_region
      %s78 = ssub.s32 2048, 2048
      %79 = vsyncadd [#allocation12], %s78
      %s80 = sshll.u32 [#allocation11], 4
      %s81 = int_to_ptr.vmem [resolvable:$true] %s80
      %86 = dma.hbm_to_vmem [thread:$0]  %s5, 2048, %s81, [#allocation12], 128, 128, 8
    $region25: #{mlp_forward.1} parent=1 // pred_fallthru
      _
    // Predicated region
    $region26: #{mlp_forward.1} parent=1 // pred_check
      _
    $region27: #{mlp_forward.1} parent=1 // pred_check_branch
      %88 = sbr.rel (0) target = $region29
    $region28: #{mlp_forward.1} parent=1 // pred_region
      %s90 = ssub.s32 16, 16
      %91 = vsyncadd [#allocation12], %s90
      %s93 = sshll.u32 [#allocation13], 4
      %s94 = int_to_ptr.vmem [resolvable:$true] %s93
      %96 = dma.hbm_to_vmem [thread:$0]  %s6, 16, %s94, [#allocation12]
    $region29: #{mlp_forward.1} parent=1 // pred_fallthru
      _
    // Predicated region
    $region30: #{mlp_forward.1} parent=1 // pred_check
      _
    $region31: #{mlp_forward.1} parent=1 // pred_check_branch
      %98 = sbr.rel (0) target = $region33
    $region32: #{mlp_forward.1} parent=1 // pred_region
      %99 = dma.done [#allocation3], 1024
    $region33: #{mlp_forward.1} parent=1 // pred_fallthru
      _
    // Predicated region
    $region34: #{mlp_forward.1} parent=1 // pred_check
      _
    $region35: #{mlp_forward.1} parent=1 // pred_check_branch
      %101 = sbr.rel (0) target = $region37
    $region36: #{mlp_forward.1} parent=1 // pred_region
      %102 = dma.done [#allocation6], 16384
    $region37: #{mlp_forward.1} parent=1 // pred_fallthru
      _
    // Predicated region
    $region38: #{mlp_forward.1} parent=1 // pred_check
      _
    $region39: #{mlp_forward.1} parent=1 // pred_check_branch
      %104 = sbr.rel (0) target = $region41
    $region40: #{mlp_forward.1} parent=1 // pred_region
      %105 = dma.done [#allocation6], 16
    $region41: #{mlp_forward.1} parent=1 // pred_fallthru
      _
    // Predicated region
    $region42: #{mlp_forward.1} parent=1 // pred_check
      _
    $region43: #{mlp_forward.1} parent=1 // pred_check_branch
      %107 = sbr.rel (0) target = $region45
    $region44: #{mlp_forward.1} parent=1 // pred_region
      %108 = dma.done [#allocation9], 2048
    $region45: #{mlp_forward.1} parent=1 // pred_fallthru
      _
    // Predicated region
    $region46: #{mlp_forward.1} parent=1 // pred_check
      _
    $region47: #{mlp_forward.1} parent=1 // pred_check_branch
      %110 = sbr.rel (0) target = $region49
    $region48: #{mlp_forward.1} parent=1 // pred_region
      %111 = dma.done [#allocation9], 16
    $region49: #{mlp_forward.1} parent=1 // pred_fallthru
      _
    // Predicated region
    $region50: #{mlp_forward.1} parent=1 // pred_check
      _
    $region51: #{mlp_forward.1} parent=1 // pred_check_branch
      %113 = sbr.rel (0) target = $region53
    $region52: #{mlp_forward.1} parent=1 // pred_region
      %114 = dma.done [#allocation12], 2048
    $region53: #{mlp_forward.1} parent=1 // pred_fallthru
      _
    // Predicated region
    $region54: #{mlp_forward.1} parent=1 // pred_check
      _
    $region55: #{mlp_forward.1} parent=1 // pred_check_branch
      %116 = sbr.rel (0) target = $region57
    $region56: #{mlp_forward.1} parent=1 // pred_region
      %117 = dma.done [#allocation12], 16
    $region57: #{mlp_forward.1} parent=1 // pred_fallthru
      _
    %v118 = vld [vmem:[#allocation2] sm:$0xff]
    %v119 = vld [vmem:[#allocation2 + $0x8] sm:$0xff]
    %v120 = vld [vmem:[#allocation2 + $0x10] sm:$0xff]
    %v121 = vld [vmem:[#allocation2 + $0x18] sm:$0xff]
    %v122 = vld [vmem:[#allocation2 + $0x20] sm:$0xff]
    %v123 = vld [vmem:[#allocation2 + $0x28] sm:$0xff]
    %v124 = vld [vmem:[#allocation2 + $0x30] sm:$0xff]
    %v125 = vld [vmem:[#allocation2 + $0x38] sm:$0xff]
    %v126 = vld [vmem:[#allocation5] sm:$0xff]
    %v127 = vld [vmem:[#allocation5 + $0x8] sm:$0xff]
    %v128 = vld [vmem:[#allocation5 + $0x10] sm:$0xff]
    %v129 = vld [vmem:[#allocation5 + $0x18] sm:$0xff]
    %v130 = vld [vmem:[#allocation5 + $0x20] sm:$0xff]
    %v131 = vld [vmem:[#allocation5 + $0x28] sm:$0xff]
    %v132 = vld [vmem:[#allocation5 + $0x30] sm:$0xff]
    %v133 = vld [vmem:[#allocation5 + $0x38] sm:$0xff]
    %v134 = vld [vmem:[#allocation5 + $0x40] sm:$0xff]
    %v135 = vld [vmem:[#allocation5 + $0x48] sm:$0xff]
    %v136 = vld [vmem:[#allocation5 + $0x50] sm:$0xff]
    %v137 = vld [vmem:[#allocation5 + $0x58] sm:$0xff]
    %v138 = vld [vmem:[#allocation5 + $0x60] sm:$0xff]
    %v139 = vld [vmem:[#allocation5 + $0x68] sm:$0xff]
    %v140 = vld [vmem:[#allocation5 + $0x70] sm:$0xff]
    %v141 = vld [vmem:[#allocation5 + $0x78] sm:$0xff]
    %v142 = vld [vmem:[#allocation5 + $0x80] sm:$0xff]
    %v143 = vld [vmem:[#allocation5 + $0x88] sm:$0xff]
    %v144 = vld [vmem:[#allocation5 + $0x90] sm:$0xff]
    %v145 = vld [vmem:[#allocation5 + $0x98] sm:$0xff]
    %v146 = vld [vmem:[#allocation5 + $0xa0] sm:$0xff]
    %v147 = vld [vmem:[#allocation5 + $0xa8] sm:$0xff]
    %v148 = vld [vmem:[#allocation5 + $0xb0] sm:$0xff]
    %v149 = vld [vmem:[#allocation5 + $0xb8] sm:$0xff]
    %v150 = vld [vmem:[#allocation5 + $0xc0] sm:$0xff]
    %v151 = vld [vmem:[#allocation5 + $0xc8] sm:$0xff]
    %v152 = vld [vmem:[#allocation5 + $0xd0] sm:$0xff]
    %v153 = vld [vmem:[#allocation5 + $0xd8] sm:$0xff]
    %v154 = vld [vmem:[#allocation5 + $0xe0] sm:$0xff]
    %v155 = vld [vmem:[#allocation5 + $0xe8] sm:$0xff]
    %v156 = vld [vmem:[#allocation5 + $0xf0] sm:$0xff]
    %v157 = vld [vmem:[#allocation5 + $0xf8] sm:$0xff]
    %v158 = vld [vmem:[#allocation5 + $0x100] sm:$0xff]
    %v159 = vld [vmem:[#allocation5 + $0x108] sm:$0xff]
    %v160 = vld [vmem:[#allocation5 + $0x110] sm:$0xff]
    %v161 = vld [vmem:[#allocation5 + $0x118] sm:$0xff]
    %v162 = vld [vmem:[#allocation5 + $0x120] sm:$0xff]
    %v163 = vld [vmem:[#allocation5 + $0x128] sm:$0xff]
    %v164 = vld [vmem:[#allocation5 + $0x130] sm:$0xff]
    %v165 = vld [vmem:[#allocation5 + $0x138] sm:$0xff]
    %v166 = vld [vmem:[#allocation5 + $0x140] sm:$0xff]
    %v167 = vld [vmem:[#allocation5 + $0x148] sm:$0xff]
    %v168 = vld [vmem:[#allocation5 + $0x150] sm:$0xff]
    %v169 = vld [vmem:[#allocation5 + $0x158] sm:$0xff]
    %v170 = vld [vmem:[#allocation5 + $0x160] sm:$0xff]
    %v171 = vld [vmem:[#allocation5 + $0x168] sm:$0xff]
    %v172 = vld [vmem:[#allocation5 + $0x170] sm:$0xff]
    %v173 = vld [vmem:[#allocation5 + $0x178] sm:$0xff]
    %v174 = vld [vmem:[#allocation5 + $0x180] sm:$0xff]
    %v175 = vld [vmem:[#allocation5 + $0x188] sm:$0xff]
    %v176 = vld [vmem:[#allocation5 + $0x190] sm:$0xff]
    %v177 = vld [vmem:[#allocation5 + $0x198] sm:$0xff]
    %v178 = vld [vmem:[#allocation5 + $0x1a0] sm:$0xff]
    %v179 = vld [vmem:[#allocation5 + $0x1a8] sm:$0xff]
    %v180 = vld [vmem:[#allocation5 + $0x1b0] sm:$0xff]
    %v181 = vld [vmem:[#allocation5 + $0x1b8] sm:$0xff]
    %v182 = vld [vmem:[#allocation5 + $0x1c0] sm:$0xff]
    %v183 = vld [vmem:[#allocation5 + $0x1c8] sm:$0xff]
    %v184 = vld [vmem:[#allocation5 + $0x1d0] sm:$0xff]
    %v185 = vld [vmem:[#allocation5 + $0x1d8] sm:$0xff]
    %v186 = vld [vmem:[#allocation5 + $0x1e0] sm:$0xff]
    %v187 = vld [vmem:[#allocation5 + $0x1e8] sm:$0xff]
    %v188 = vld [vmem:[#allocation5 + $0x1f0] sm:$0xff]
    %v189 = vld [vmem:[#allocation5 + $0x1f8] sm:$0xff]
    %v190 = vld [vmem:[#allocation5 + $0x200] sm:$0xff]
    %v191 = vld [vmem:[#allocation5 + $0x208] sm:$0xff]
    %v192 = vld [vmem:[#allocation5 + $0x210] sm:$0xff]
    %v193 = vld [vmem:[#allocation5 + $0x218] sm:$0xff]
    %v194 = vld [vmem:[#allocation5 + $0x220] sm:$0xff]
    %v195 = vld [vmem:[#allocation5 + $0x228] sm:$0xff]
    %v196 = vld [vmem:[#allocation5 + $0x230] sm:$0xff]
    %v197 = vld [vmem:[#allocation5 + $0x238] sm:$0xff]
    %v198 = vld [vmem:[#allocation5 + $0x240] sm:$0xff]
    %v199 = vld [vmem:[#allocation5 + $0x248] sm:$0xff]
    %v200 = vld [vmem:[#allocation5 + $0x250] sm:$0xff]
    %v201 = vld [vmem:[#allocation5 + $0x258] sm:$0xff]
    %v202 = vld [vmem:[#allocation5 + $0x260] sm:$0xff]
    %v203 = vld [vmem:[#allocation5 + $0x268] sm:$0xff]
    %v204 = vld [vmem:[#allocation5 + $0x270] sm:$0xff]
    %v205 = vld [vmem:[#allocation5 + $0x278] sm:$0xff]
    %v206 = vld [vmem:[#allocation5 + $0x280] sm:$0xff]
    %v207 = vld [vmem:[#allocation5 + $0x288] sm:$0xff]
    %v208 = vld [vmem:[#allocation5 + $0x290] sm:$0xff]
    %v209 = vld [vmem:[#allocation5 + $0x298] sm:$0xff]
    %v210 = vld [vmem:[#allocation5 + $0x2a0] sm:$0xff]
    %v211 = vld [vmem:[#allocation5 + $0x2a8] sm:$0xff]
    %v212 = vld [vmem:[#allocation5 + $0x2b0] sm:$0xff]
    %v213 = vld [vmem:[#allocation5 + $0x2b8] sm:$0xff]
    %v214 = vld [vmem:[#allocation5 + $0x2c0] sm:$0xff]
    %v215 = vld [vmem:[#allocation5 + $0x2c8] sm:$0xff]
    %v216 = vld [vmem:[#allocation5 + $0x2d0] sm:$0xff]
    %v217 = vld [vmem:[#allocation5 + $0x2d8] sm:$0xff]
    %v218 = vld [vmem:[#allocation5 + $0x2e0] sm:$0xff]
    %v219 = vld [vmem:[#allocation5 + $0x2e8] sm:$0xff]
    %v220 = vld [vmem:[#allocation5 + $0x2f0] sm:$0xff]
    %v221 = vld [vmem:[#allocation5 + $0x2f8] sm:$0xff]
    %v222 = vld [vmem:[#allocation5 + $0x300] sm:$0xff]
    %v223 = vld [vmem:[#allocation5 + $0x308] sm:$0xff]
    %v224 = vld [vmem:[#allocation5 + $0x310] sm:$0xff]
    %v225 = vld [vmem:[#allocation5 + $0x318] sm:$0xff]
    %v226 = vld [vmem:[#allocation5 + $0x320] sm:$0xff]
    %v227 = vld [vmem:[#allocation5 + $0x328] sm:$0xff]
    %v228 = vld [vmem:[#allocation5 + $0x330] sm:$0xff]
    %v229 = vld [vmem:[#allocation5 + $0x338] sm:$0xff]
    %v230 = vld [vmem:[#allocation5 + $0x340] sm:$0xff]
    %v231 = vld [vmem:[#allocation5 + $0x348] sm:$0xff]
    %v232 = vld [vmem:[#allocation5 + $0x350] sm:$0xff]
    %v233 = vld [vmem:[#allocation5 + $0x358] sm:$0xff]
    %v234 = vld [vmem:[#allocation5 + $0x360] sm:$0xff]
    %v235 = vld [vmem:[#allocation5 + $0x368] sm:$0xff]
    %v236 = vld [vmem:[#allocation5 + $0x370] sm:$0xff]
    %v237 = vld [vmem:[#allocation5 + $0x378] sm:$0xff]
    %v238 = vld [vmem:[#allocation5 + $0x380] sm:$0xff]
    %v239 = vld [vmem:[#allocation5 + $0x388] sm:$0xff]
    %v240 = vld [vmem:[#allocation5 + $0x390] sm:$0xff]
    %v241 = vld [vmem:[#allocation5 + $0x398] sm:$0xff]
    %v242 = vld [vmem:[#allocation5 + $0x3a0] sm:$0xff]
    %v243 = vld [vmem:[#allocation5 + $0x3a8] sm:$0xff]
    %v244 = vld [vmem:[#allocation5 + $0x3b0] sm:$0xff]
    %v245 = vld [vmem:[#allocation5 + $0x3b8] sm:$0xff]
    %v246 = vld [vmem:[#allocation5 + $0x3c0] sm:$0xff]
    %v247 = vld [vmem:[#allocation5 + $0x3c8] sm:$0xff]
    %v248 = vld [vmem:[#allocation5 + $0x3d0] sm:$0xff]
    %v249 = vld [vmem:[#allocation5 + $0x3d8] sm:$0xff]
    %v250 = vld [vmem:[#allocation5 + $0x3e0] sm:$0xff]
    %v251 = vld [vmem:[#allocation5 + $0x3e8] sm:$0xff]
    %v252 = vld [vmem:[#allocation5 + $0x3f0] sm:$0xff]
    %v253 = vld [vmem:[#allocation5 + $0x3f8] sm:$0xff]
    %v254 = vld [vmem:[#allocation7] sm:$0x1]
    %v256 = vlaneseq
    %v257 = vshrl.u32 %v256, 7
    %v258 = vsub.s32 0, %v257
    %v259 = vrot.slane %v254, %v258
    %261 = vmatprep.subr.mxu0 0.0
    %262 = vmatpush1.msra.mxu0 %v126
    %263 = vmatprep.subr.mxu0 0.0
    %264 = vmatpush1.msra.mxu0 %v127
    %265 = vmatprep.subr.mxu0 0.0
    %266 = vmatpush1.msra.mxu0 %v128
    %267 = vmatprep.subr.mxu0 0.0
    %268 = vmatpush1.msra.mxu0 %v129
    %269 = vmatprep.subr.mxu0 0.0
    %270 = vmatpush1.msra.mxu0 %v130
    %271 = vmatprep.subr.mxu0 0.0
    %272 = vmatpush1.msra.mxu0 %v131
    %273 = vmatprep.subr.mxu0 0.0
    %274 = vmatpush1.msra.mxu0 %v132
    %275 = vmatprep.subr.mxu0 0.0
    %276 = vmatpush1.msra.mxu0 %v133
    %277 = vmatprep.subr.mxu0 0.0
    %278 = vmatpush1.msra.mxu0 %v134
    %279 = vmatprep.subr.mxu0 0.0
    %280 = vmatpush1.msra.mxu0 %v135
    %281 = vmatprep.subr.mxu0 0.0
    %282 = vmatpush1.msra.mxu0 %v136
    %283 = vmatprep.subr.mxu0 0.0
    %284 = vmatpush1.msra.mxu0 %v137
    %285 = vmatprep.subr.mxu0 0.0
    %286 = vmatpush1.msra.mxu0 %v138
    %287 = vmatprep.subr.mxu0 0.0
    %288 = vmatpush1.msra.mxu0 %v139
    %289 = vmatprep.subr.mxu0 0.0
    %290 = vmatpush1.msra.mxu0 %v140
    %291 = vmatprep.subr.mxu0 0.0
    %292 = vmatpush1.msra.mxu0 %v141
    %293 = vmatprep.subr.mxu0 0.0
    %294 = vmatpush1.msra.mxu0 %v142
    %295 = vmatprep.subr.mxu0 0.0
    %296 = vmatpush1.msra.mxu0 %v143
    %297 = vmatprep.subr.mxu0 0.0
    %298 = vmatpush1.msra.mxu0 %v144
    %299 = vmatprep.subr.mxu0 0.0
    %300 = vmatpush1.msra.mxu0 %v145
    %301 = vmatprep.subr.mxu0 0.0
    %302 = vmatpush1.msra.mxu0 %v146
    %303 = vmatprep.subr.mxu0 0.0
    %304 = vmatpush1.msra.mxu0 %v147
    %305 = vmatprep.subr.mxu0 0.0
    %306 = vmatpush1.msra.mxu0 %v148
    %307 = vmatprep.subr.mxu0 0.0
    %308 = vmatpush1.msra.mxu0 %v149
    %309 = vmatprep.subr.mxu0 0.0
    %310 = vmatpush1.msra.mxu0 %v150
    %311 = vmatprep.subr.mxu0 0.0
    %312 = vmatpush1.msra.mxu0 %v151
    %313 = vmatprep.subr.mxu0 0.0
    %314 = vmatpush1.msra.mxu0 %v152
    %315 = vmatprep.subr.mxu0 0.0
    %316 = vmatpush1.msra.mxu0 %v153
    %317 = vmatprep.subr.mxu0 0.0
    %318 = vmatpush1.msra.mxu0 %v154
    %319 = vmatprep.subr.mxu0 0.0
    %320 = vmatpush1.msra.mxu0 %v155
    %321 = vmatprep.subr.mxu0 0.0
    %322 = vmatpush1.msra.mxu0 %v156
    %323 = vmatprep.subr.mxu0 0.0
    %324 = vmatpush1.msra.mxu0 %v157
    %325 = vmatprep.mubr.f32.mxu0 %v119
    %326 = vmatmul.mubr.f32.gmra.mrb[0].mxu0 %v118
    %v327 = vpop.f32.mrb[0].mxu0
    %v328 = vadd.f32 %v259, %v327
    %v329 = vpop.f32.mrb[0].mxu0
    %330 = vdwg.mxu0
    %331 = vmatprep.subr.mxu0 0.0
    %332 = vmatpush1.msra.mxu0 %v158
    %333 = vmatprep.subr.mxu0 0.0
    %334 = vmatpush1.msra.mxu0 %v159
    %335 = vmatprep.subr.mxu0 0.0
    %336 = vmatpush1.msra.mxu0 %v160
    %337 = vmatprep.subr.mxu0 0.0
    %338 = vmatpush1.msra.mxu0 %v161
    %339 = vmatprep.subr.mxu0 0.0
    %340 = vmatpush1.msra.mxu0 %v162
    %341 = vmatprep.subr.mxu0 0.0
    %342 = vmatpush1.msra.mxu0 %v163
    %343 = vmatprep.subr.mxu0 0.0
    %344 = vmatpush1.msra.mxu0 %v164
    %345 = vmatprep.subr.mxu0 0.0
    %346 = vmatpush1.msra.mxu0 %v165
    %347 = vmatprep.subr.mxu0 0.0
    %348 = vmatpush1.msra.mxu0 %v166
    %349 = vmatprep.subr.mxu0 0.0
    %350 = vmatpush1.msra.mxu0 %v167
    %351 = vmatprep.subr.mxu0 0.0
    %352 = vmatpush1.msra.mxu0 %v168
    %353 = vmatprep.subr.mxu0 0.0
    %354 = vmatpush1.msra.mxu0 %v169
    %355 = vmatprep.subr.mxu0 0.0
    %356 = vmatpush1.msra.mxu0 %v170
    %357 = vmatprep.subr.mxu0 0.0
    %358 = vmatpush1.msra.mxu0 %v171
    %359 = vmatprep.subr.mxu0 0.0
    %360 = vmatpush1.msra.mxu0 %v172
    %361 = vmatprep.subr.mxu0 0.0
    %362 = vmatpush1.msra.mxu0 %v173
    %363 = vmatprep.subr.mxu0 0.0
    %364 = vmatpush1.msra.mxu0 %v174
    %365 = vmatprep.subr.mxu0 0.0
    %366 = vmatpush1.msra.mxu0 %v175
    %367 = vmatprep.subr.mxu0 0.0
    %368 = vmatpush1.msra.mxu0 %v176
    %369 = vmatprep.subr.mxu0 0.0
    %370 = vmatpush1.msra.mxu0 %v177
    %371 = vmatprep.subr.mxu0 0.0
    %372 = vmatpush1.msra.mxu0 %v178
    %373 = vmatprep.subr.mxu0 0.0
    %374 = vmatpush1.msra.mxu0 %v179
    %375 = vmatprep.subr.mxu0 0.0
    %376 = vmatpush1.msra.mxu0 %v180
    %377 = vmatprep.subr.mxu0 0.0
    %378 = vmatpush1.msra.mxu0 %v181
    %379 = vmatprep.subr.mxu0 0.0
    %380 = vmatpush1.msra.mxu0 %v182
    %381 = vmatprep.subr.mxu0 0.0
    %382 = vmatpush1.msra.mxu0 %v183
    %383 = vmatprep.subr.mxu0 0.0
    %384 = vmatpush1.msra.mxu0 %v184
    %385 = vmatprep.subr.mxu0 0.0
    %386 = vmatpush1.msra.mxu0 %v185
    %387 = vmatprep.subr.mxu0 0.0
    %388 = vmatpush1.msra.mxu0 %v186
    %389 = vmatprep.subr.mxu0 0.0
    %390 = vmatpush1.msra.mxu0 %v187
    %391 = vmatprep.subr.mxu0 0.0
    %392 = vmatpush1.msra.mxu0 %v188
    %393 = vmatprep.subr.mxu0 0.0
    %394 = vmatpush1.msra.mxu0 %v189
    %395 = vmatprep.mubr.f32.mxu0 %v121
    %396 = vmatmul.mubr.f32.gmra.mrb[0].mxu0 %v120
    %v397 = vpop.f32.mrb[0].mxu0
    %v398 = vadd.f32 %v328, %v397
    %v399 = vpop.f32.mrb[0].mxu0
    %400 = vdwg.mxu0
    %401 = vmatprep.subr.mxu0 0.0
    %402 = vmatpush1.msra.mxu0 %v190
    %403 = vmatprep.subr.mxu0 0.0
    %404 = vmatpush1.msra.mxu0 %v191
    %405 = vmatprep.subr.mxu0 0.0
    %406 = vmatpush1.msra.mxu0 %v192
    %407 = vmatprep.subr.mxu0 0.0
    %408 = vmatpush1.msra.mxu0 %v193
    %409 = vmatprep.subr.mxu0 0.0
    %410 = vmatpush1.msra.mxu0 %v194
    %411 = vmatprep.subr.mxu0 0.0
    %412 = vmatpush1.msra.mxu0 %v195
    %413 = vmatprep.subr.mxu0 0.0
    %414 = vmatpush1.msra.mxu0 %v196
    %415 = vmatprep.subr.mxu0 0.0
    %416 = vmatpush1.msra.mxu0 %v197
    %417 = vmatprep.subr.mxu0 0.0
    %418 = vmatpush1.msra.mxu0 %v198
    %419 = vmatprep.subr.mxu0 0.0
    %420 = vmatpush1.msra.mxu0 %v199
    %421 = vmatprep.subr.mxu0 0.0
    %422 = vmatpush1.msra.mxu0 %v200
    %423 = vmatprep.subr.mxu0 0.0
    %424 = vmatpush1.msra.mxu0 %v201
    %425 = vmatprep.subr.mxu0 0.0
    %426 = vmatpush1.msra.mxu0 %v202
    %427 = vmatprep.subr.mxu0 0.0
    %428 = vmatpush1.msra.mxu0 %v203
    %429 = vmatprep.subr.mxu0 0.0
    %430 = vmatpush1.msra.mxu0 %v204
    %431 = vmatprep.subr.mxu0 0.0
    %432 = vmatpush1.msra.mxu0 %v205
    %433 = vmatprep.subr.mxu0 0.0
    %434 = vmatpush1.msra.mxu0 %v206
    %435 = vmatprep.subr.mxu0 0.0
    %436 = vmatpush1.msra.mxu0 %v207
    %437 = vmatprep.subr.mxu0 0.0
    %438 = vmatpush1.msra.mxu0 %v208
    %439 = vmatprep.subr.mxu0 0.0
    %440 = vmatpush1.msra.mxu0 %v209
    %441 = vmatprep.subr.mxu0 0.0
    %442 = vmatpush1.msra.mxu0 %v210
    %443 = vmatprep.subr.mxu0 0.0
    %444 = vmatpush1.msra.mxu0 %v211
    %445 = vmatprep.subr.mxu0 0.0
    %446 = vmatpush1.msra.mxu0 %v212
    %447 = vmatprep.subr.mxu0 0.0
    %448 = vmatpush1.msra.mxu0 %v213
    %449 = vmatprep.subr.mxu0 0.0
    %450 = vmatpush1.msra.mxu0 %v214
    %451 = vmatprep.subr.mxu0 0.0
    %452 = vmatpush1.msra.mxu0 %v215
    %453 = vmatprep.subr.mxu0 0.0
    %454 = vmatpush1.msra.mxu0 %v216
    %455 = vmatprep.subr.mxu0 0.0
    %456 = vmatpush1.msra.mxu0 %v217
    %457 = vmatprep.subr.mxu0 0.0
    %458 = vmatpush1.msra.mxu0 %v218
    %459 = vmatprep.subr.mxu0 0.0
    %460 = vmatpush1.msra.mxu0 %v219
    %461 = vmatprep.subr.mxu0 0.0
    %462 = vmatpush1.msra.mxu0 %v220
    %463 = vmatprep.subr.mxu0 0.0
    %464 = vmatpush1.msra.mxu0 %v221
    %465 = vmatprep.mubr.f32.mxu0 %v123
    %466 = vmatmul.mubr.f32.gmra.mrb[0].mxu0 %v122
    %v467 = vpop.f32.mrb[0].mxu0
    %v468 = vadd.f32 %v398, %v467
    %v469 = vpop.f32.mrb[0].mxu0
    %470 = vdwg.mxu0
    %471 = vmatprep.subr.mxu0 0.0
    %472 = vmatpush1.msra.mxu0 %v222
    %473 = vmatprep.subr.mxu0 0.0
    %474 = vmatpush1.msra.mxu0 %v223
    %475 = vmatprep.subr.mxu0 0.0
    %476 = vmatpush1.msra.mxu0 %v224
    %477 = vmatprep.subr.mxu0 0.0
    %478 = vmatpush1.msra.mxu0 %v225
    %479 = vmatprep.subr.mxu0 0.0
    %480 = vmatpush1.msra.mxu0 %v226
    %481 = vmatprep.subr.mxu0 0.0
    %482 = vmatpush1.msra.mxu0 %v227
    %483 = vmatprep.subr.mxu0 0.0
    %484 = vmatpush1.msra.mxu0 %v228
    %485 = vmatprep.subr.mxu0 0.0
    %486 = vmatpush1.msra.mxu0 %v229
    %487 = vmatprep.subr.mxu0 0.0
    %488 = vmatpush1.msra.mxu0 %v230
    %489 = vmatprep.subr.mxu0 0.0
    %490 = vmatpush1.msra.mxu0 %v231
    %491 = vmatprep.subr.mxu0 0.0
    %492 = vmatpush1.msra.mxu0 %v232
    %493 = vmatprep.subr.mxu0 0.0
    %494 = vmatpush1.msra.mxu0 %v233
    %495 = vmatprep.subr.mxu0 0.0
    %496 = vmatpush1.msra.mxu0 %v234
    %497 = vmatprep.subr.mxu0 0.0
    %498 = vmatpush1.msra.mxu0 %v235
    %499 = vmatprep.subr.mxu0 0.0
    %500 = vmatpush1.msra.mxu0 %v236
    %501 = vmatprep.subr.mxu0 0.0
    %502 = vmatpush1.msra.mxu0 %v237
    %503 = vmatprep.subr.mxu0 0.0
    %504 = vmatpush1.msra.mxu0 %v238
    %505 = vmatprep.subr.mxu0 0.0
    %506 = vmatpush1.msra.mxu0 %v239
    %507 = vmatprep.subr.mxu0 0.0
    %508 = vmatpush1.msra.mxu0 %v240
    %509 = vmatprep.subr.mxu0 0.0
    %510 = vmatpush1.msra.mxu0 %v241
    %511 = vmatprep.subr.mxu0 0.0
    %512 = vmatpush1.msra.mxu0 %v242
    %513 = vmatprep.subr.mxu0 0.0
    %514 = vmatpush1.msra.mxu0 %v243
    %515 = vmatprep.subr.mxu0 0.0
    %516 = vmatpush1.msra.mxu0 %v244
    %517 = vmatprep.subr.mxu0 0.0
    %518 = vmatpush1.msra.mxu0 %v245
    %519 = vmatprep.subr.mxu0 0.0
    %520 = vmatpush1.msra.mxu0 %v246
    %521 = vmatprep.subr.mxu0 0.0
    %522 = vmatpush1.msra.mxu0 %v247
    %523 = vmatprep.subr.mxu0 0.0
    %524 = vmatpush1.msra.mxu0 %v248
    %525 = vmatprep.subr.mxu0 0.0
    %526 = vmatpush1.msra.mxu0 %v249
    %527 = vmatprep.subr.mxu0 0.0
    %528 = vmatpush1.msra.mxu0 %v250
    %529 = vmatprep.subr.mxu0 0.0
    %530 = vmatpush1.msra.mxu0 %v251
    %531 = vmatprep.subr.mxu0 0.0
    %532 = vmatpush1.msra.mxu0 %v252
    %533 = vmatprep.subr.mxu0 0.0
    %534 = vmatpush1.msra.mxu0 %v253
    %535 = vmatprep.mubr.f32.mxu0 %v125
    %536 = vmatmul.mubr.f32.gmra.mrb[0].mxu0 %v124
    %v537 = vpop.f32.mrb[0].mxu0
    %v538 = vadd.f32 %v468, %v537
    %v539 = vpop.f32.mrb[0].mxu0
    %540 = vdwg.mxu0
    %v541 = vmax.f32 %v538, 0.0
    %v542 = vld [vmem:[#allocation8] sm:$0xff]
    %v543 = vld [vmem:[#allocation8 + $0x8] sm:$0xff]
    %v544 = vld [vmem:[#allocation8 + $0x10] sm:$0xff]
    %v545 = vld [vmem:[#allocation8 + $0x18] sm:$0xff]
    %v546 = vld [vmem:[#allocation8 + $0x20] sm:$0xff]
    %v547 = vld [vmem:[#allocation8 + $0x28] sm:$0xff]
    %v548 = vld [vmem:[#allocation8 + $0x30] sm:$0xff]
    %v549 = vld [vmem:[#allocation8 + $0x38] sm:$0xff]
    %v550 = vld [vmem:[#allocation8 + $0x40] sm:$0xff]
    %v551 = vld [vmem:[#allocation8 + $0x48] sm:$0xff]
    %v552 = vld [vmem:[#allocation8 + $0x50] sm:$0xff]
    %v553 = vld [vmem:[#allocation8 + $0x58] sm:$0xff]
    %v554 = vld [vmem:[#allocation8 + $0x60] sm:$0xff]
    %v555 = vld [vmem:[#allocation8 + $0x68] sm:$0xff]
    %v556 = vld [vmem:[#allocation8 + $0x70] sm:$0xff]
    %v557 = vld [vmem:[#allocation8 + $0x78] sm:$0xff]
    %v558 = vld [vmem:[#allocation10] sm:$0x1]
    %v560 = vlaneseq
    %v561 = vshrl.u32 %v560, 7
    %v562 = vsub.s32 0, %v561
    %v563 = vrot.slane %v558, %v562
    %565 = vmatprep.subr.mxu0 0.0
    %566 = vmatpush1.msra.mxu0 %v542
    %567 = vmatprep.subr.mxu0 0.0
    %568 = vmatpush1.msra.mxu0 %v543
    %569 = vmatprep.subr.mxu0 0.0
    %570 = vmatpush1.msra.mxu0 %v544
    %571 = vmatprep.subr.mxu0 0.0
    %572 = vmatpush1.msra.mxu0 %v545
    %573 = vmatprep.subr.mxu0 0.0
    %574 = vmatpush1.msra.mxu0 %v546
    %575 = vmatprep.subr.mxu0 0.0
    %576 = vmatpush1.msra.mxu0 %v547
    %577 = vmatprep.subr.mxu0 0.0
    %578 = vmatpush1.msra.mxu0 %v548
    %579 = vmatprep.subr.mxu0 0.0
    %580 = vmatpush1.msra.mxu0 %v549
    %581 = vmatprep.subr.mxu0 0.0
    %582 = vmatpush1.msra.mxu0 %v550
    %583 = vmatprep.subr.mxu0 0.0
    %584 = vmatpush1.msra.mxu0 %v551
    %585 = vmatprep.subr.mxu0 0.0
    %586 = vmatpush1.msra.mxu0 %v552
    %587 = vmatprep.subr.mxu0 0.0
    %588 = vmatpush1.msra.mxu0 %v553
    %589 = vmatprep.subr.mxu0 0.0
    %590 = vmatpush1.msra.mxu0 %v554
    %591 = vmatprep.subr.mxu0 0.0
    %592 = vmatpush1.msra.mxu0 %v555
    %593 = vmatprep.subr.mxu0 0.0
    %594 = vmatpush1.msra.mxu0 %v556
    %595 = vmatprep.subr.mxu0 0.0
    %596 = vmatpush1.msra.mxu0 %v557
    %597 = vmatprep.subr.mxu0 0.0
    %598 = vmatpush1.msra.mxu0 0.0
    %599 = vmatprep.subr.mxu0 0.0
    %600 = vmatpush1.msra.mxu0 0.0
    %601 = vmatprep.subr.mxu0 0.0
    %602 = vmatpush1.msra.mxu0 0.0
    %603 = vmatprep.subr.mxu0 0.0
    %604 = vmatpush1.msra.mxu0 0.0
    %605 = vmatprep.subr.mxu0 0.0
    %606 = vmatpush1.msra.mxu0 0.0
    %607 = vmatprep.subr.mxu0 0.0
    %608 = vmatpush1.msra.mxu0 0.0
    %609 = vmatprep.subr.mxu0 0.0
    %610 = vmatpush1.msra.mxu0 0.0
    %611 = vmatprep.subr.mxu0 0.0
    %612 = vmatpush1.msra.mxu0 0.0
    %613 = vmatprep.subr.mxu0 0.0
    %614 = vmatpush1.msra.mxu0 0.0
    %615 = vmatprep.subr.mxu0 0.0
    %616 = vmatpush1.msra.mxu0 0.0
    %617 = vmatprep.subr.mxu0 0.0
    %618 = vmatpush1.msra.mxu0 0.0
    %619 = vmatprep.subr.mxu0 0.0
    %620 = vmatpush1.msra.mxu0 0.0
    %621 = vmatprep.subr.mxu0 0.0
    %622 = vmatpush1.msra.mxu0 0.0
    %623 = vmatprep.subr.mxu0 0.0
    %624 = vmatpush1.msra.mxu0 0.0
    %625 = vmatprep.subr.mxu0 0.0
    %626 = vmatpush1.msra.mxu0 0.0
    %627 = vmatprep.subr.mxu0 0.0
    %628 = vmatpush1.msra.mxu0 0.0
    %629 = vmatprep.mubr.f32.mxu0 0.0
    %630 = vmatmul.mubr.f32.gmra.mrb[0].mxu0 %v541
    %v631 = vpop.f32.mrb[0].mxu0
    %v632 = vadd.f32 %v563, %v631
    %v633 = vpop.f32.mrb[0].mxu0
    %634 = vdwg.mxu0
    %v635 = vmax.f32 %v632, 0.0
    %v636 = vld [vmem:[#allocation11] sm:$0xff]
    %v637 = vld [vmem:[#allocation11 + $0x8] sm:$0xff]
    %v638 = vld [vmem:[#allocation11 + $0x10] sm:$0xff]
    %v639 = vld [vmem:[#allocation11 + $0x18] sm:$0xff]
    %v640 = vld [vmem:[#allocation11 + $0x20] sm:$0xff]
    %v641 = vld [vmem:[#allocation11 + $0x28] sm:$0xff]
    %v642 = vld [vmem:[#allocation11 + $0x30] sm:$0xff]
    %v643 = vld [vmem:[#allocation11 + $0x38] sm:$0xff]
    %v644 = vld [vmem:[#allocation11 + $0x40] sm:$0xff]
    %v645 = vld [vmem:[#allocation11 + $0x48] sm:$0xff]
    %v646 = vld [vmem:[#allocation11 + $0x50] sm:$0xff]
    %v647 = vld [vmem:[#allocation11 + $0x58] sm:$0xff]
    %v648 = vld [vmem:[#allocation11 + $0x60] sm:$0xff]
    %v649 = vld [vmem:[#allocation11 + $0x68] sm:$0xff]
    %v650 = vld [vmem:[#allocation11 + $0x70] sm:$0xff]
    %v651 = vld [vmem:[#allocation11 + $0x78] sm:$0xff]
    %v652 = vld [vmem:[#allocation13] sm:$0x1]
    %v654 = vlaneseq
    %v655 = vshrl.u32 %v654, 7
    %v656 = vsub.s32 0, %v655
    %v657 = vrot.slane %v652, %v656
    %659 = vmatprep.subr.mxu0 0.0
    %660 = vmatpush1.msra.mxu0 %v636
    %661 = vmatprep.subr.mxu0 0.0
    %662 = vmatpush1.msra.mxu0 %v637
    %663 = vmatprep.subr.mxu0 0.0
    %664 = vmatpush1.msra.mxu0 %v638
    %665 = vmatprep.subr.mxu0 0.0
    %666 = vmatpush1.msra.mxu0 %v639
    %667 = vmatprep.subr.mxu0 0.0
    %668 = vmatpush1.msra.mxu0 %v640
    %669 = vmatprep.subr.mxu0 0.0
    %670 = vmatpush1.msra.mxu0 %v641
    %671 = vmatprep.subr.mxu0 0.0
    %672 = vmatpush1.msra.mxu0 %v642
    %673 = vmatprep.subr.mxu0 0.0
    %674 = vmatpush1.msra.mxu0 %v643
    %675 = vmatprep.subr.mxu0 0.0
    %676 = vmatpush1.msra.mxu0 %v644
    %677 = vmatprep.subr.mxu0 0.0
    %678 = vmatpush1.msra.mxu0 %v645
    %679 = vmatprep.subr.mxu0 0.0
    %680 = vmatpush1.msra.mxu0 %v646
    %681 = vmatprep.subr.mxu0 0.0
    %682 = vmatpush1.msra.mxu0 %v647
    %683 = vmatprep.subr.mxu0 0.0
    %684 = vmatpush1.msra.mxu0 %v648
    %685 = vmatprep.subr.mxu0 0.0
    %686 = vmatpush1.msra.mxu0 %v649
    %687 = vmatprep.subr.mxu0 0.0
    %688 = vmatpush1.msra.mxu0 %v650
    %689 = vmatprep.subr.mxu0 0.0
    %690 = vmatpush1.msra.mxu0 %v651
    %691 = vmatprep.subr.mxu0 0.0
    %692 = vmatpush1.msra.mxu0 0.0
    %693 = vmatprep.subr.mxu0 0.0
    %694 = vmatpush1.msra.mxu0 0.0
    %695 = vmatprep.subr.mxu0 0.0
    %696 = vmatpush1.msra.mxu0 0.0
    %697 = vmatprep.subr.mxu0 0.0
    %698 = vmatpush1.msra.mxu0 0.0
    %699 = vmatprep.subr.mxu0 0.0
    %700 = vmatpush1.msra.mxu0 0.0
    %701 = vmatprep.subr.mxu0 0.0
    %702 = vmatpush1.msra.mxu0 0.0
    %703 = vmatprep.subr.mxu0 0.0
    %704 = vmatpush1.msra.mxu0 0.0
    %705 = vmatprep.subr.mxu0 0.0
    %706 = vmatpush1.msra.mxu0 0.0
    %707 = vmatprep.subr.mxu0 0.0
    %708 = vmatpush1.msra.mxu0 0.0
    %709 = vmatprep.subr.mxu0 0.0
    %710 = vmatpush1.msra.mxu0 0.0
    %711 = vmatprep.subr.mxu0 0.0
    %712 = vmatpush1.msra.mxu0 0.0
    %713 = vmatprep.subr.mxu0 0.0
    %714 = vmatpush1.msra.mxu0 0.0
    %715 = vmatprep.subr.mxu0 0.0
    %716 = vmatpush1.msra.mxu0 0.0
    %717 = vmatprep.subr.mxu0 0.0
    %718 = vmatpush1.msra.mxu0 0.0
    %719 = vmatprep.subr.mxu0 0.0
    %720 = vmatpush1.msra.mxu0 0.0
    %721 = vmatprep.subr.mxu0 0.0
    %722 = vmatpush1.msra.mxu0 0.0
    %723 = vmatprep.mubr.f32.mxu0 0.0
    %724 = vmatmul.mubr.f32.gmra.mrb[0].mxu0 %v635
    %v725 = vpop.f32.mrb[0].mxu0
    %v726 = vadd.f32 %v657, %v725
    %v727 = vpop.f32.mrb[0].mxu0
    %728 = vdwg.mxu0
    %729 = vst [vmem:[#allocation14] sm:$0xff] %v538
    %730 = vst [vmem:[#allocation15] sm:$0xff] %v632
    %731 = vst [vmem:[#allocation17] sm:$0xff] %v726
    // Predicated region
    $region58: #{mlp_forward.1} parent=1 // pred_check
      _
    $region59: #{mlp_forward.1} parent=1 // pred_check_branch
      %733 = sbr.rel (0) target = $region61
    $region60: #{mlp_forward.1} parent=1 // pred_region
      %s735 = ssub.s32 128, 128
      %736 = vsyncadd [#allocation4], %s735
      %s738 = sshll.u32 [#allocation14], 4
      %s739 = int_to_ptr.vmem [resolvable:$true] %s738
      %741 = dma.vmem_to_hbm [thread:$0]  %s739, 128, %s7, [#allocation4]
    $region61: #{mlp_forward.1} parent=1 // pred_fallthru
      _
    // Predicated region
    $region62: #{mlp_forward.1} parent=1 // pred_check
      _
    $region63: #{mlp_forward.1} parent=1 // pred_check_branch
      %743 = sbr.rel (0) target = $region65
    $region64: #{mlp_forward.1} parent=1 // pred_region
      %s745 = ssub.s32 128, 128
      %746 = vsyncadd [#allocation16], %s745
      %s748 = sshll.u32 [#allocation15], 4
      %s749 = int_to_ptr.vmem [resolvable:$true] %s748
      %751 = dma.vmem_to_hbm [thread:$0]  %s749, 128, %s8, [#allocation16]
    $region65: #{mlp_forward.1} parent=1 // pred_fallthru
      _
    // Predicated region
    $region66: #{mlp_forward.1} parent=1 // pred_check
      _
    $region67: #{mlp_forward.1} parent=1 // pred_check_branch
      %753 = sbr.rel (0) target = $region69
    $region68: #{mlp_forward.1} parent=1 // pred_region
      %s755 = ssub.s32 128, 128
      %756 = vsyncadd [#allocation16], %s755
      %s758 = sshll.u32 [#allocation17], 4
      %s759 = int_to_ptr.vmem [resolvable:$true] %s758
      %761 = dma.vmem_to_hbm [thread:$0]  %s759, 128, %s9, [#allocation16]
    $region69: #{mlp_forward.1} parent=1 // pred_fallthru
      _
    // Predicated region
    $region70: #{mlp_forward.1} parent=1 // pred_check
      _
    $region71: #{mlp_forward.1} parent=1 // pred_check_branch
      %763 = sbr.rel (0) target = $region73
    $region72: #{mlp_forward.1} parent=1 // pred_region
      %764 = dma.done [#allocation4], 128
    $region73: #{mlp_forward.1} parent=1 // pred_fallthru
      _
    // Predicated region
    $region74: #{mlp_forward.1} parent=1 // pred_check
      _
    $region75: #{mlp_forward.1} parent=1 // pred_check_branch
      %766 = sbr.rel (0) target = $region77
    $region76: #{mlp_forward.1} parent=1 // pred_region
      %767 = dma.done [#allocation16], 128
    $region77: #{mlp_forward.1} parent=1 // pred_fallthru
      _
    // Predicated region
    $region78: #{mlp_forward.1} parent=1 // pred_check
      _
    $region79: #{mlp_forward.1} parent=1 // pred_check_branch
      %769 = sbr.rel (0) target = $region81
    $region80: #{mlp_forward.1} parent=1 // pred_region
      %770 = dma.done [#allocation16], 128
    $region81: #{mlp_forward.1} parent=1 // pred_fallthru
      _
    %771 = vsyncpa [#allocation3], 1
    %772 = vsyncpa [#allocation6], 1
    %773 = vsyncpa [#allocation9], 1
    %774 = vsyncpa [#allocation12], 1
    %775 = vsyncpa [#allocation4], 1
    %776 = vsyncpa [#allocation16], 1

</llo_original>
